<compile_context>
chip_gen: v7x
topology: tpu7x:2x2x1
jax: 0.10.0
libtpu: 0.0.40
codegen_flags: <defaults>
</compile_context>

<pallas_src>
import functools

import jax
import jax.numpy as jnp
from jax import lax
from jax.experimental import pallas as pl
from jax.experimental.pallas import tpu as pltpu


_VMEM_LIMIT = 32 * 1024 * 1024  # explicit scoped-VMEM budget, safe on v5e/v6e/v7x


# ----------------------------- linear projection ----------------------------

def _linear_kernel(x_ref, w_ref, b_ref, o_ref):
    # x: (TM, Din); w: (Dout, Din) torch layout -- contract on Din directly,
    # the MXU consumes the transposed operand natively (no w.T anywhere).
    y = lax.dot_general(
        x_ref[...], w_ref[...],
        dimension_numbers=(((1,), (1,)), ((), ())),
        preferred_element_type=jnp.float32,
    )
    o_ref[...] = (y + b_ref[...]).astype(o_ref.dtype)


def _row_tile(n):
    """Largest multiple-of-8 row tile dividing n, preferring >=2 grid steps."""
    for t in (512, 256, 128, 64, 32, 16, 8):
        if n % t == 0 and n // t >= 2:
            return t
    for t in (512, 256, 128, 64, 32, 16, 8):
        if n % t == 0:
            return t
    return n  # not 8-divisible: single full block (still legal: equals full dim)


def linear(x, w, b):
    """torch nn.Linear semantics: y = x @ w.T + b, with w of shape (Dout, Din)."""
    N, Din = x.shape
    Dout = w.shape[0]
    tm = _row_tile(N)
    return pl.pallas_call(
        _linear_kernel,
        grid=(N // tm,),
        out_shape=jax.ShapeDtypeStruct((N, Dout), x.dtype),
        in_specs=[
            pl.BlockSpec((tm, Din), lambda i: (i, 0)),
            pl.BlockSpec((Dout, Din), lambda i: (0, 0)),   # weight stays resident
            pl.BlockSpec((1, Dout), lambda i: (0, 0)),
        ],
        out_specs=pl.BlockSpec((tm, Dout), lambda i: (i, 0)),
        compiler_params=pltpu.CompilerParams(
            dimension_semantics=("parallel",),
            vmem_limit_bytes=_VMEM_LIMIT,
        ),
    )(x, w, b.reshape(1, Dout))


# ------------------------------ attention core ------------------------------

def _attn_kernel(q_ref, k_ref, v_ref, o_ref, wn_ref, wr_ref, *, scaling, inv_heads):
    # Per batch element; all heads packed into one step.
    q = q_ref[0] * scaling          # (H, T, Hd)
    k = k_ref[0]                    # (H, S, Hd)
    v = v_ref[0]                    # (H, S, Hd)

    # Raw logits: contract head_dim with k in its native layout (no k.T).
    s = jnp.einsum('htd,hsd->hts', q, k,
                   preferred_element_type=jnp.float32)          # (H, T, S)
    wr_ref[0] = (jnp.sum(s, axis=0) * inv_heads).astype(wr_ref.dtype)

    # Softmax over source axis; reciprocal goes to the EUP slot.
    m = jnp.max(s, axis=-1, keepdims=True)
    e = jnp.exp(s - m)
    p = e * pl.reciprocal(jnp.sum(e, axis=-1, keepdims=True), approx=True)
    wn_ref[0] = (jnp.sum(p, axis=0) * inv_heads).astype(wn_ref.dtype)

    out = jnp.einsum('hts,hsd->htd', p.astype(v.dtype), v,
                     preferred_element_type=jnp.float32)        # (H, T, Hd)
    o_ref[0] = out.astype(o_ref.dtype)


def attention_core(q, k, v, scaling):
    """q/k/v: (bsz, num_heads, seq, head_dim). One grid step per batch element."""
    B, H, T, Hd = q.shape
    S = k.shape[2]
    kernel = functools.partial(_attn_kernel, scaling=scaling, inv_heads=1.0 / H)
    return pl.pallas_call(
        kernel,
        grid=(B,),
        out_shape=(
            jax.ShapeDtypeStruct((B, H, T, Hd), q.dtype),
            jax.ShapeDtypeStruct((B, T, S), jnp.float32),   # softmax mean over heads
            jax.ShapeDtypeStruct((B, T, S), jnp.float32),   # raw-logit mean over heads
        ),
        in_specs=[
            pl.BlockSpec((1, H, T, Hd), lambda b: (b, 0, 0, 0)),
            pl.BlockSpec((1, H, S, Hd), lambda b: (b, 0, 0, 0)),
            pl.BlockSpec((1, H, S, Hd), lambda b: (b, 0, 0, 0)),
        ],
        out_specs=(
            pl.BlockSpec((1, H, T, Hd), lambda b: (b, 0, 0, 0)),
            pl.BlockSpec((1, T, S), lambda b: (b, 0, 0)),
            pl.BlockSpec((1, T, S), lambda b: (b, 0, 0)),
        ),
        compiler_params=pltpu.CompilerParams(
            dimension_semantics=("parallel",),
            vmem_limit_bytes=_VMEM_LIMIT,
        ),
    )(q, k, v)


# --------------------------- parameter init (glue) ---------------------------

def _xavier_normal(key, shape):
    fan_out, fan_in = shape
    std = (2.0 / (fan_in + fan_out)) ** 0.5
    return std * jax.random.normal(key, shape, dtype=jnp.float32)


def init_params(key, embed_dim):
    # NOTE: kdim/vdim != embed_dim is not supported (the reference module's own
    # head-split view also requires kdim == vdim == embed_dim).
    kq, kk, kv, ko = jax.random.split(key, 4)
    return {
        "wq": _xavier_normal(kq, (embed_dim, embed_dim)),
        "bq": jnp.zeros((embed_dim,), jnp.float32),
        "wk": _xavier_normal(kk, (embed_dim, embed_dim)),
        "bk": jnp.zeros((embed_dim,), jnp.float32),
        "wv": _xavier_normal(kv, (embed_dim, embed_dim)),
        "bv": jnp.zeros((embed_dim,), jnp.float32),
        "wo": _xavier_normal(ko, (embed_dim, embed_dim)),
        "bo": jnp.zeros((embed_dim,), jnp.float32),
    }


# ------------------------------- forward pass --------------------------------

def multihead_attention(params, query, key, value, num_heads, fuse_qkv=None):
    """Mirrors MultiheadAttention.forward default path.

    query: (tgt_len, bsz, embed_dim); key/value: (src_len, bsz, embed_dim).
    Returns (attn_output (tgt, bsz, embed),
             softmax attn weights mean over heads   (bsz, tgt, src),
             raw-logit attn weights mean over heads (bsz, tgt, src)).
    """
    tgt_len, bsz, embed_dim = query.shape
    src_len = key.shape[0]
    head_dim = embed_dim // num_heads
    scaling = float(head_dim) ** (-0.5)

    if fuse_qkv is None:
        fuse_qkv = (query is key) and (key is value)

    if fuse_qkv:
        # Self-attention: one fused (3E, E) projection -> single MXU pass.
        w_qkv = jnp.concatenate([params["wq"], params["wk"], params["wv"]], axis=0)
        b_qkv = jnp.concatenate([params["bq"], params["bk"], params["bv"]], axis=0)
        qkv = linear(query.reshape(tgt_len * bsz, embed_dim), w_qkv, b_qkv)
        q = qkv[:, :embed_dim]
        k = qkv[:, embed_dim:2 * embed_dim]
        v = qkv[:, 2 * embed_dim:]
    else:
        # Cross-attention: inputs differ, so the GEMMs cannot be merged.
        q = linear(query.reshape(tgt_len * bsz, embed_dim), params["wq"], params["bq"])
        k = linear(key.reshape(src_len * bsz, embed_dim), params["wk"], params["bk"])
        v = linear(value.reshape(src_len * bsz, embed_dim), params["wv"], params["bv"])

    # (seq, bsz, H, Hd) -> (bsz, H, seq, Hd): batch/head major so every grid step
    # sees a clean (seq, head_dim) slab per head (satisfies (8,128) blocking).
    def to_bhsd(x, seq):
        return x.reshape(seq, bsz, num_heads, head_dim).transpose(1, 2, 0, 3)

    qh = to_bhsd(q, tgt_len)
    kh = to_bhsd(k, src_len)
    vh = to_bhsd(v, src_len)

    attn_out, w_norm_mean, w_raw_mean = attention_core(qh, kh, vh, scaling)

    # (bsz, H, T, Hd) -> (tgt, bsz, embed)
    attn_out = attn_out.transpose(2, 0, 1, 3).reshape(tgt_len * bsz, embed_dim)
    attn_out = linear(attn_out, params["wo"], params["bo"]).reshape(
        tgt_len, bsz, embed_dim)

    return attn_out, w_norm_mean, w_raw_mean


# ----------------------------------- main ------------------------------------

if __name__ == "__main__":
    embed_dim = 32
    num_heads = 4
    tgt_len = 8
    src_len = 8
    bsz = 2

    root = jax.random.PRNGKey(0)
    kp, kq, kk, kv = jax.random.split(root, 4)

    params = init_params(kp, embed_dim)
    query = jax.random.normal(kq, (tgt_len, bsz, embed_dim), dtype=jnp.float32)
    key = jax.random.normal(kk, (src_len, bsz, embed_dim), dtype=jnp.float32)
    value = jax.random.normal(kv, (src_len, bsz, embed_dim), dtype=jnp.float32)

    # Cross-attention path (distinct q/k/v -> three tiled projection calls).
    out, w_norm, w_raw = multihead_attention(params, query, key, value, num_heads)

    # Self-attention path exercises the fused (3E, E) QKV projection; check it
    # matches the unfused path on the same inputs.
    out_sa, wn_sa, wr_sa = multihead_attention(params, query, query, query, num_heads)
    out_su, wn_su, wr_su = multihead_attention(
        params, query, query, query, num_heads, fuse_qkv=False)

    jax.block_until_ready((out, w_norm, w_raw, out_sa, wn_sa, wr_sa))

    assert out.shape == (tgt_len, bsz, embed_dim)
    assert w_norm.shape == (bsz, tgt_len, src_len)
    assert w_raw.shape == (bsz, tgt_len, src_len)
    # Softmax rows (mean over heads) should still sum to ~1.
    assert jnp.allclose(jnp.sum(w_norm, axis=-1), 1.0, atol=1e-2)
    # Fused vs unfused self-attention must agree.
    assert jnp.allclose(out_sa, out_su, atol=1e-5, rtol=1e-5)
    assert jnp.allclose(wn_sa, wn_su, atol=1e-5, rtol=1e-5)
    assert jnp.allclose(wr_sa, wr_su, atol=1e-5, rtol=1e-5)

    print("KERNEL_OK")
</pallas_src>

<mosaic_0001>
module attributes {stable_mosaic.version = 11 : i64} {
  func.func @_linear_kernel(%arg0: i32, %arg1: memref<8x32xf32, #tpu.memory_space<vmem>>, %arg2: memref<32x32xf32, #tpu.memory_space<vmem>>, %arg3: memref<1x32xf32, #tpu.memory_space<vmem>>, %arg4: memref<8x32xf32, #tpu.memory_space<vmem>>) attributes {dimension_semantics = [#tpu.dimension_semantics<parallel>], iteration_bounds = array<i64: 2>, scalar_prefetch = 0 : i64, scratch_operands = 0 : i64, tpu.core_type = #tpu.core_type<tc>, window_params = [{transform_indices = @transform_0, window_bounds = array<i64: 8, 32>}, {pipeline_mode = #tpu.pipeline_mode<synchronous>, transform_indices = @transform_1, window_bounds = array<i64: 32, 32>}, {pipeline_mode = #tpu.pipeline_mode<synchronous>, transform_indices = @transform_2, window_bounds = array<i64: 1, 32>}, {transform_indices = @transform_3, window_bounds = array<i64: 8, 32>}]} {
    %c0 = arith.constant 0 : index
    %c0_0 = arith.constant 0 : index
    %0 = vector.load %arg1[%c0, %c0_0] : memref<8x32xf32, #tpu.memory_space<vmem>>, vector<8x32xf32>
    %c0_1 = arith.constant 0 : index
    %c0_2 = arith.constant 0 : index
    %1 = vector.load %arg2[%c0_1, %c0_2] : memref<32x32xf32, #tpu.memory_space<vmem>>, vector<32x32xf32>
    %cst = arith.constant dense<0.000000e+00> : vector<8x32xf32>
    %2 = tpu.matmul %0, %1, %cst {dimension_numbers = #tpu.dot_dimension_numbers<[1], [1], [0], [0], [0, 0, 1, 0], [], []>} : vector<8x32xf32>, vector<32x32xf32>, vector<8x32xf32> -> vector<8x32xf32>
    %c0_3 = arith.constant 0 : index
    %c0_4 = arith.constant 0 : index
    %3 = vector.load %arg3[%c0_3, %c0_4] : memref<1x32xf32, #tpu.memory_space<vmem>>, vector<1x32xf32>
    %4 = vector.broadcast %3 : vector<1x32xf32> to vector<8x32xf32>
    %5 = arith.addf %2, %4 : vector<8x32xf32>
    %c0_5 = arith.constant 0 : index
    %c0_6 = arith.constant 0 : index
    %6 = vector.load %arg4[%c0_5, %c0_6] : memref<8x32xf32, #tpu.memory_space<vmem>>, vector<8x32xf32>
    tpu.vector_store %arg4[%c0_5, %c0_6], %5 {strides = array<i32>} : memref<8x32xf32, #tpu.memory_space<vmem>>, vector<8x32xf32>,
    return
  }
  func.func @transform_0(%arg0: i32) -> (i32, i32) {
    %c0_i32 = arith.constant 0 : i32
    %c0_i32_0 = arith.constant 0 : i32
    return %arg0, %c0_i32 : i32, i32
  }
  func.func @transform_1(%arg0: i32) -> (i32, i32) {
    %c0_i32 = arith.constant 0 : i32
    %c0_i32_0 = arith.constant 0 : i32
    %c0_i32_1 = arith.constant 0 : i32
    return %c0_i32, %c0_i32_0 : i32, i32
  }
  func.func @transform_2(%arg0: i32) -> (i32, i32) {
    %c0_i32 = arith.constant 0 : i32
    %c0_i32_0 = arith.constant 0 : i32
    %c0_i32_1 = arith.constant 0 : i32
    return %c0_i32, %c0_i32_0 : i32, i32
  }
  func.func @transform_3(%arg0: i32) -> (i32, i32) {
    %c0_i32 = arith.constant 0 : i32
    %c0_i32_0 = arith.constant 0 : i32
    return %arg0, %c0_i32 : i32, i32
  }
}

</mosaic_0001>

<llo_original>
// kernel: tpu_custom_call.1
$region0: #{tpu_custom_call.1}
  #allocation0 [shape = 'u32[]', space=smem, size = 0x4, offset = 0x4, fixed_abs, tag = 'smem constant byte address 0x4 - core index']
  #allocation1 [shape = 'u32[144,128]{1,0:T(1,128)}', space=vmem, size = 0x12000, scoped, tag = 'internal scratch']
  %s0 = inlined_call_operand.hbm [shape: f32[16,32], index: 0, kind: input, shape index: {}]
  %s1 = inlined_call_operand.hbm [shape: f32[32,32], index: 1, kind: input, shape index: {}]
  %s2 = inlined_call_operand.vmem [shape: f32[1,32], index: 2, kind: input, shape index: {}]
  %s3 = inlined_call_operand.hbm [shape: f32[16,32], index: 3, kind: output, shape index: {}]
  %s4 = sld [smem:[#allocation0]]
  $region53: #{tpu_custom_call.1} parent=0
    _
  %s6 = ssub.s32 1, %s4
  %s7 = scalar_select 0, %s6, %s4
  $region1: #{tpu_custom_call.1} parent=0
    #allocation2 [shape = 'u8[8192]{0}', space=vmem, size = 0x2000, scoped, tag = 'input window, operand 0']
    #allocation3 [shape = 's32[2]{0}', space=sflag, size = 0x8, scoped, tag = 'scoped memory for tpu_custom_call.1']
    #allocation4 [shape = 's32[2]{0}', space=sflag, size = 0x8, scoped, tag = 'scoped memory for tpu_custom_call.1']
    #allocation5 [shape = 'u8[16384]{0}', space=vmem, size = 0x4000, scoped, tag = 'input window, operand 1, single buffered']
    #allocation6 [shape = 's32[1]{0}', space=sflag, size = 0x4, scoped, tag = 'scoped memory for tpu_custom_call.1']
    #allocation7 [shape = 'u8[8192]{0}', space=vmem, size = 0x2000, scoped, tag = 'output window, operand 0']
    %8 = vsyncpa [#allocation3], 0
    %s9 = scalar_lea.sflag [#allocation3], 1
    %10 = vsyncpa %s9, 0
    %11 = vsyncpa [#allocation6], 0
    %12 = vsyncpa [#allocation4], 0
    %s13 = scalar_lea.sflag [#allocation4], 1
    %14 = vsyncpa %s13, 0
    loop: start=0, step=1, limit=4
    $region2: #{tpu_custom_call.1} parent=1 // loop_pre_header
      _
    $region3: #{tpu_custom_call.1} parent=1 // loop_header
      %s16 = sphi 0, %s20
      %p17 = scmp.ge.s32.totalorder %s16, 4
      %s26 = sphi 0, %s28
      %s29 = sphi 0, %s26
      %s30 = sphi 0, %s29
      %s46 = sphi 0, %s30
      %s50 = sphi 0, %s50
      %s52 = sphi 0, %s50
      %s53 = sphi 0, %s52
      %s67 = sphi 0, %s53
      %s71 = sphi 0, %s71
      %s73 = sphi 0, %s71
      %s74 = sphi 0, %s73
      %s88 = sphi 0, %s74
      %s94 = sphi 0, %s96
      %s97 = sphi 0, %s94
      %s98 = sphi 0, %s97
      %s114 = sphi 0, %s98
    $region4: #{tpu_custom_call.1} parent=1 // loop_header_branch
      %19 = sbr.rel (%p17) target = $region8
    $region5: #{tpu_custom_call.1} parent=1 // loop_body
      %s21 = ssub.s32 %s16, 1
      %s22 = ssub.s32 %s16, 2
      %s23 = sadd.s32 %s16, 1
      %s24 = ssub.s32 %s16, %s23
      %p25 = scmp.eq.s32.totalorder %s24, 0
      %s27 = sadd.s32 %s26, 1
      %s28 = scalar_select %p25, %s26, %s27
      %p31 = pneg %p25
      %p32 = scmp.eq.s32.totalorder %s16, 1
      %p33 = por %p31, %p32
      %p34 = scmp.ne.s32.totalorder %s26, %s29
      %p35 = scmp.eq.s32.totalorder %s16, 0
      %p36 = por %p34, %p35
      %p37 = scmp.ne.s32.totalorder %s26, %s29
      %p38 = scmp.eq.s32.totalorder %s21, 1
      %p39 = por %p37, %p38
      %p40 = scmp.ne.s32.totalorder %s29, %s30
      %p41 = scmp.eq.s32.totalorder %s21, 0
      %p42 = por %p40, %p41
      %p43 = scmp.ne.s32.totalorder %s29, %s30
      %p44 = scmp.eq.s32.totalorder %s22, 1
      %p45 = por %p43, %p44
      %p47 = scmp.ne.s32.totalorder %s30, %s46
      %p48 = scmp.eq.s32.totalorder %s22, 0
      %p49 = por %p47, %p48
      %s51 = sadd.s32 %s50, 1
      %p54 = scmp.eq.s32.totalorder %s16, 1
      %p55 = scmp.ne.s32.totalorder %s50, %s52
      %p56 = scmp.eq.s32.totalorder %s16, 0
      %p57 = por %p55, %p56
      %p58 = scmp.ne.s32.totalorder %s50, %s52
      %p59 = scmp.eq.s32.totalorder %s21, 1
      %p60 = por %p58, %p59
      %p61 = scmp.ne.s32.totalorder %s52, %s53
      %p62 = scmp.eq.s32.totalorder %s21, 0
      %p63 = por %p61, %p62
      %p64 = scmp.ne.s32.totalorder %s52, %s53
      %p65 = scmp.eq.s32.totalorder %s22, 1
      %p66 = por %p64, %p65
      %p68 = scmp.ne.s32.totalorder %s53, %s67
      %p69 = scmp.eq.s32.totalorder %s22, 0
      %p70 = por %p68, %p69
      %s72 = sadd.s32 %s71, 1
      %p75 = scmp.eq.s32.totalorder %s16, 1
      %p76 = scmp.ne.s32.totalorder %s71, %s73
      %p77 = scmp.eq.s32.totalorder %s16, 0
      %p78 = por %p76, %p77
      %p79 = scmp.ne.s32.totalorder %s71, %s73
      %p80 = scmp.eq.s32.totalorder %s21, 1
      %p81 = por %p79, %p80
      %p82 = scmp.ne.s32.totalorder %s73, %s74
      %p83 = scmp.eq.s32.totalorder %s21, 0
      %p84 = por %p82, %p83
      %p85 = scmp.ne.s32.totalorder %s73, %s74
      %p86 = scmp.eq.s32.totalorder %s22, 1
      %p87 = por %p85, %p86
      %p89 = scmp.ne.s32.totalorder %s74, %s88
      %p90 = scmp.eq.s32.totalorder %s22, 0
      %p91 = por %p89, %p90
      %s92 = ssub.s32 %s16, %s23
      %p93 = scmp.eq.s32.totalorder %s92, 0
      %s95 = sadd.s32 %s94, 1
      %s96 = scalar_select %p93, %s94, %s95
      %p99 = pneg %p93
      %p100 = scmp.eq.s32.totalorder %s16, 1
      %p101 = por %p99, %p100
      %p102 = scmp.ne.s32.totalorder %s94, %s97
      %p103 = scmp.eq.s32.totalorder %s16, 0
      %p104 = por %p102, %p103
      %p105 = scmp.ne.s32.totalorder %s94, %s97
      %p106 = scmp.eq.s32.totalorder %s21, 1
      %p107 = por %p105, %p106
      %p108 = scmp.ne.s32.totalorder %s97, %s98
      %p109 = scmp.eq.s32.totalorder %s21, 0
      %p110 = por %p108, %p109
      %p111 = scmp.ne.s32.totalorder %s97, %s98
      %p112 = scmp.eq.s32.totalorder %s22, 1
      %p113 = por %p111, %p112
      %p115 = scmp.ne.s32.totalorder %s98, %s114
      %p116 = scmp.eq.s32.totalorder %s22, 0
      %p117 = por %p115, %p116
      %p118 = scmp.le.s32.totalorder 1, %s16
      %p119 = scmp.lt.s32.totalorder %s16, 3
      %p120 = pnand %p118, %p119
      %p121 = pneg %p120
      // Predicated region
      $region9: #{tpu_custom_call.1} parent=5 // pred_check
        _
      $region10: #{tpu_custom_call.1} parent=5 // pred_check_branch
        %123 = sbr.rel (%p120) target = $region12
      $region11: #{tpu_custom_call.1} parent=5 // pred_region
        %s124 = ssub.s32 %s16, 1
        // Predicated region
        $region13: #{tpu_custom_call.1} parent=11 // pred_check
          %p125 = pneg %p63
        $region14: #{tpu_custom_call.1} parent=11 // pred_check_branch
          %127 = sbr.rel (%p125) target = $region16
        $region15: #{tpu_custom_call.1} parent=11 // pred_region
          %s129 = ssub.s32 512, 512
          %130 = vsyncadd [#allocation6], %s129
          %s131 = sshll.u32 [#allocation5], 4
          %s132 = int_to_ptr.vmem [resolvable:$true] %s131
          %137 = dma.hbm_to_vmem [thread:$0]  %s1, 512, %s132, [#allocation6], 128, 128, 8
        $region16: #{tpu_custom_call.1} parent=11 // pred_fallthru
          _
        // Predicated region
        $region17: #{tpu_custom_call.1} parent=11 // pred_check
          %p138 = pneg %p84
        $region18: #{tpu_custom_call.1} parent=11 // pred_check_branch
          %140 = sbr.rel (%p138) target = $region20
        $region19: #{tpu_custom_call.1} parent=11 // pred_region
          _
        $region20: #{tpu_custom_call.1} parent=11 // pred_fallthru
          _
      $region12: #{tpu_custom_call.1} parent=5 // pred_fallthru
        _
      %p141 = scmp.lt.s32.totalorder %s16, 2
      // Predicated region
      $region21: #{tpu_custom_call.1} parent=5 // pred_check
        %p142 = pneg %p141
      $region22: #{tpu_custom_call.1} parent=5 // pred_check_branch
        %144 = sbr.rel (%p142) target = $region24
      $region23: #{tpu_custom_call.1} parent=5 // pred_region
        // Predicated region
        $region25: #{tpu_custom_call.1} parent=23 // pred_check
          %p145 = pneg %p36
        $region26: #{tpu_custom_call.1} parent=23 // pred_check_branch
          %147 = sbr.rel (%p145) target = $region28
        $region27: #{tpu_custom_call.1} parent=23 // pred_region
          %s148 = sand.u32 %s26, 1
          %s149 = scalar_lea.sflag [#allocation3], %s148
          %s150 = sand.u32 %s26, 1
          %s151 = smul.addr %s150, 8
          %s152 = scalar_lea.vmem [#allocation2], %s151
          %s154 = ssub.s32 128, 128
          %155 = vsyncadd %s149, %s154
          %s156 = smul.addr %s16, 128
          %s157 = scalar_lea.hbm %s0, %s156
          %s159 = sshll.u32 %s152, 4
          %s160 = int_to_ptr.vmem [resolvable:$true] %s159
          %162 = dma.hbm_to_vmem [thread:$0]  %s157, 128, %s160, %s149
        $region28: #{tpu_custom_call.1} parent=23 // pred_fallthru
          _
      $region24: #{tpu_custom_call.1} parent=5 // pred_fallthru
        _
      %p163 = scmp.le.s32.totalorder 1, %s16
      %p164 = scmp.lt.s32.totalorder %s16, 3
      %p165 = pnand %p163, %p164
      %p166 = pneg %p165
      // Predicated region
      $region29: #{tpu_custom_call.1} parent=5 // pred_check
        _
      $region30: #{tpu_custom_call.1} parent=5 // pred_check_branch
        %168 = sbr.rel (%p165) target = $region32
      $region31: #{tpu_custom_call.1} parent=5 // pred_region
        %s169 = ssub.s32 %s16, 1
        %s170 = sand.u32 %s29, 1
        %s171 = scalar_lea.sflag [#allocation3], %s170
        %s172 = sand.u32 %s29, 1
        %s173 = smul.addr %s172, 8
        %s174 = scalar_lea.vmem [#allocation2], %s173
        // Predicated region
        $region33: #{tpu_custom_call.1} parent=31 // pred_check
          %p175 = pneg %p42
        $region34: #{tpu_custom_call.1} parent=31 // pred_check_branch
          %177 = sbr.rel (%p175) target = $region36
        $region35: #{tpu_custom_call.1} parent=31 // pred_region
          %178 = dma.done %s171, 128
        $region36: #{tpu_custom_call.1} parent=31 // pred_fallthru
          _
        // Predicated region
        $region37: #{tpu_custom_call.1} parent=31 // pred_check
          %p179 = pneg %p63
        $region38: #{tpu_custom_call.1} parent=31 // pred_check_branch
          %181 = sbr.rel (%p179) target = $region40
        $region39: #{tpu_custom_call.1} parent=31 // pred_region
          %182 = dma.done [#allocation6], 512
        $region40: #{tpu_custom_call.1} parent=31 // pred_fallthru
          _
        %s183 = sand.u32 %s29, 1
        %s184 = scalar_lea.sflag [#allocation3], %s183
        %s185 = sand.u32 %s29, 1
        %s186 = smul.addr %s185, 8
        %s187 = scalar_lea.vmem [#allocation2], %s186
        %p188 = pneg %p42
        %p189 = pneg %p39
        %p190 = pneg %p63
        %p191 = pneg %p60
        %p192 = pneg %p84
        %p193 = pneg %p81
        %p194 = pneg %p110
        %p195 = pneg %p107
        %s196 = sand.u32 %s97, 1
        %s197 = scalar_lea.sflag [#allocation4], %s196
        %s198 = sand.u32 %s97, 1
        %s199 = smul.addr %s198, 8
        %s200 = scalar_lea.vmem [#allocation7], %s199
        %v201 = vld [vmem:[%s174] sm:$0xff]
        %v202 = vld [vmem:[#allocation5] sm:$0xff]
        %v203 = vld [vmem:[#allocation5 + $0x8] sm:$0xff]
        %v204 = vld [vmem:[#allocation5 + $0x10] sm:$0xff]
        %v205 = vld [vmem:[#allocation5 + $0x18] sm:$0xff]
        %v206 = vld [vmem:[%s2] sm:$0x1]
        %v208 = vlaneseq
        %v209 = vshrl.u32 %v208, 7
        %v210 = vsub.s32 0, %v209
        %v211 = vrot.slane %v206, %v210
        %vm213 = vcmask 261120
        %v215 = vsel %vm213, %v201, 0
        %v218 = vsel %vm213, %v202, 0
        %v221 = vsel %vm213, %v203, 0
        %v224 = vsel %vm213, %v204, 0
        %v227 = vsel %vm213, %v205, 0
        %229 = vmatprep.subr.mxu0 0.0
        %230 = vmatpush1.xpose.msra.mxu0 %v218
        %231 = vmatprep.subr.mxu0 0.0
        %232 = vmatpush1.xpose.msra.mxu0 %v221
        %233 = vmatprep.subr.mxu0 0.0
        %234 = vmatpush1.xpose.msra.mxu0 %v224
        %235 = vmatprep.subr.mxu0 0.0
        %236 = vmatpush1.xpose.msra.mxu0 %v227
        %237 = vmatprep.subr.mxu0 0.0
        %238 = vmatpush1.xpose.msra.mxu0 0.0
        %239 = vmatprep.subr.mxu0 0.0
        %240 = vmatpush1.xpose.msra.mxu0 0.0
        %241 = vmatprep.subr.mxu0 0.0
        %242 = vmatpush1.xpose.msra.mxu0 0.0
        %243 = vmatprep.subr.mxu0 0.0
        %244 = vmatpush1.xpose.msra.mxu0 0.0
        %245 = vmatprep.subr.mxu0 0.0
        %246 = vmatpush1.xpose.msra.mxu0 0.0
        %247 = vmatprep.subr.mxu0 0.0
        %248 = vmatpush1.xpose.msra.mxu0 0.0
        %249 = vmatprep.subr.mxu0 0.0
        %250 = vmatpush1.xpose.msra.mxu0 0.0
        %251 = vmatprep.subr.mxu0 0.0
        %252 = vmatpush1.xpose.msra.mxu0 0.0
        %253 = vmatprep.subr.mxu0 0.0
        %254 = vmatpush1.xpose.msra.mxu0 0.0
        %255 = vmatprep.subr.mxu0 0.0
        %256 = vmatpush1.xpose.msra.mxu0 0.0
        %257 = vmatprep.subr.mxu0 0.0
        %258 = vmatpush1.xpose.msra.mxu0 0.0
        %259 = vmatprep.subr.mxu0 0.0
        %260 = vmatpush1.xpose.msra.mxu0 0.0
        %261 = vmatprep.subr.mxu0 0.0
        %262 = vmatpush1.xpose.msra.mxu0 0.0
        %263 = vmatprep.subr.mxu0 0.0
        %264 = vmatpush1.xpose.msra.mxu0 0.0
        %265 = vmatprep.subr.mxu0 0.0
        %266 = vmatpush1.xpose.msra.mxu0 0.0
        %267 = vmatprep.subr.mxu0 0.0
        %268 = vmatpush1.xpose.msra.mxu0 0.0
        %269 = vmatprep.subr.mxu0 0.0
        %270 = vmatpush1.xpose.msra.mxu0 0.0
        %271 = vmatprep.subr.mxu0 0.0
        %272 = vmatpush1.xpose.msra.mxu0 0.0
        %273 = vmatprep.subr.mxu0 0.0
        %274 = vmatpush1.xpose.msra.mxu0 0.0
        %275 = vmatprep.subr.mxu0 0.0
        %276 = vmatpush1.xpose.msra.mxu0 0.0
        %277 = vmatprep.subr.mxu0 0.0
        %278 = vmatpush1.xpose.msra.mxu0 0.0
        %279 = vmatprep.subr.mxu0 0.0
        %280 = vmatpush1.xpose.msra.mxu0 0.0
        %281 = vmatprep.subr.mxu0 0.0
        %282 = vmatpush1.xpose.msra.mxu0 0.0
        %283 = vmatprep.subr.mxu0 0.0
        %284 = vmatpush1.xpose.msra.mxu0 0.0
        %285 = vmatprep.subr.mxu0 0.0
        %286 = vmatpush1.xpose.msra.mxu0 0.0
        %287 = vmatprep.subr.mxu0 0.0
        %288 = vmatpush1.xpose.msra.mxu0 0.0
        %289 = vmatprep.subr.mxu0 0.0
        %290 = vmatpush1.xpose.msra.mxu0 0.0
        %291 = vmatprep.subr.mxu0 0.0
        %292 = vmatpush1.xpose.msra.mxu0 0.0
        %293 = vmatprep.mubr.f32.mxu0 0.0
        %294 = vmatmul.mubr.f32.gmra.mrb[0].mxu0 %v215
        %v295 = vpop.f32.mrb[0].mxu0
        %v296 = vadd.f32 %v211, %v295
        %v297 = vpop.f32.mrb[0].mxu0
        %298 = vdwg.mxu0
        %299 = vst.msk [vmem:[%s200] sm:$0xff] %vm213, %v296
        %s300 = sand.u32 %s97, 1
        %s301 = scalar_lea.sflag [#allocation4], %s300
        %s302 = sand.u32 %s97, 1
        %s303 = smul.addr %s302, 8
        %s304 = scalar_lea.vmem [#allocation7], %s303
        // Predicated region
        $region41: #{tpu_custom_call.1} parent=31 // pred_check
          %p305 = pneg %p107
        $region42: #{tpu_custom_call.1} parent=31 // pred_check_branch
          %307 = sbr.rel (%p305) target = $region44
        $region43: #{tpu_custom_call.1} parent=31 // pred_region
          %s309 = ssub.s32 128, 128
          %310 = vsyncadd %s301, %s309
          %s311 = smul.addr %s21, 128
          %s312 = scalar_lea.hbm %s3, %s311
          %s314 = sshll.u32 %s304, 4
          %s315 = int_to_ptr.vmem [resolvable:$true] %s314
          %317 = dma.vmem_to_hbm [thread:$0]  %s315, 128, %s312, %s301
        $region44: #{tpu_custom_call.1} parent=31 // pred_fallthru
          _
      $region32: #{tpu_custom_call.1} parent=5 // pred_fallthru
        _
      %p318 = scmp.le.s32.totalorder 2, %s16
      // Predicated region
      $region45: #{tpu_custom_call.1} parent=5 // pred_check
        %p319 = pneg %p318
      $region46: #{tpu_custom_call.1} parent=5 // pred_check_branch
        %321 = sbr.rel (%p319) target = $region48
      $region47: #{tpu_custom_call.1} parent=5 // pred_region
        %s322 = ssub.s32 %s16, 2
        // Predicated region
        $region49: #{tpu_custom_call.1} parent=47 // pred_check
          %p323 = pneg %p113
        $region50: #{tpu_custom_call.1} parent=47 // pred_check_branch
          %325 = sbr.rel (%p323) target = $region52
        $region51: #{tpu_custom_call.1} parent=47 // pred_region
          %s326 = sand.u32 %s98, 1
          %s327 = scalar_lea.sflag [#allocation4], %s326
          %s328 = sand.u32 %s98, 1
          %s329 = smul.addr %s328, 8
          %s330 = scalar_lea.vmem [#allocation7], %s329
          %331 = dma.done %s327, 128
        $region52: #{tpu_custom_call.1} parent=47 // pred_fallthru
          _
      $region48: #{tpu_custom_call.1} parent=5 // pred_fallthru
        _
    $region6: #{tpu_custom_call.1} parent=1 // loop_footer
      %s20 = sadd.s32 1, %s16
    $region7: #{tpu_custom_call.1} parent=1 // loop_footer_branch
      %15 = sbr.rel target = $region3
    $region8: #{tpu_custom_call.1} parent=1 // loop_exit
      _
    %332 = vsyncpa [#allocation3], 1
    %s333 = scalar_lea.sflag [#allocation3], 1
    %334 = vsyncpa %s333, 1
    %335 = vsyncpa [#allocation6], 1
    %336 = vsyncpa [#allocation4], 1
    %s337 = scalar_lea.sflag [#allocation4], 1
    %338 = vsyncpa %s337, 1

</llo_original>
